<compile_context>
chip_gen: v7x
topology: tpu7x:2x2x1
jax: 0.10.0
libtpu: 0.0.40
codegen_flags: <defaults>
</compile_context>

<pallas_src>
import jax
import jax.numpy as jnp
from jax.experimental import pallas as pl
from jax.experimental.pallas import tpu as pltpu

LANE = 128
SUBLANE = 8
# Per-block VMEM budget (f32 bytes). 2 MiB -> 4 double-buffered buffers
# (in + out) = 8 MiB, comfortably within v5e's 16 MiB default scoped VMEM.
_MAX_TILE_BYTES = 2 * 1024 * 1024


def _poly_kernel(coef_ref, x_ref, o_ref):
    # coef_ref: SMEM (4,)  -> a, b, c, d
    # x_ref / o_ref: VMEM (TILE_ROWS, WIDTH) tile
    a = coef_ref[0]
    b = coef_ref[1]
    c = coef_ref[2]
    d = coef_ref[3]
    x = x_ref[...]
    # Horner form: a + x*(b + x*(c + x*d))  (3 multiplies, no x^2/x^3 temps)
    o_ref[...] = a + x * (b + x * (c + x * d))


def poly_sine_forward(x, a, b, c, d):
    """Compute a + b*x + c*x^2 + d*x^3 elementwise via a Pallas TPU kernel.

    x: any-shape float array (the PyTorch driver uses shape (N, 1)).
    Returns an array with the same shape/dtype as x.
    """
    orig_shape = x.shape
    orig_dtype = x.dtype

    flat = x.reshape(-1).astype(jnp.float32)
    n = flat.shape[0]

    # Pick the widest lane-dense width that divides N exactly (no pad / slice
    # needed).  Fall back to padding only when N is not a multiple of 128.
    width = None
    for w in (8192, 4096, 2048, 1024, 512, 256, 128):
        if n % w == 0:
            width = w
            break
    padded = False
    if width is None:
        width = 1024
        n_pad = pl.cdiv(n, width) * width
        flat = jnp.pad(flat, (0, n_pad - n))  # unavoidable: N not /128
        padded = True

    rows = flat.shape[0] // width
    x2d = flat.reshape(rows, width)

    # Row-tile size: as large as fits the VMEM budget, multiple of 8 sublanes.
    if rows <= SUBLANE:
        tile_rows = rows  # block dim == full array dim is always legal
    else:
        tile_rows = min(rows, _MAX_TILE_BYTES // (width * 4))
        tile_rows = max(SUBLANE, (tile_rows // SUBLANE) * SUBLANE)

    grid = (pl.cdiv(rows, tile_rows),)  # partial last block handled by Pallas

    coef = jnp.stack([a, b, c, d]).astype(jnp.float32)  # (4,) scalars -> SMEM

    out2d = pl.pallas_call(
        _poly_kernel,
        out_shape=jax.ShapeDtypeStruct((rows, width), jnp.float32),
        grid=grid,
        in_specs=[
            pl.BlockSpec(memory_space=pltpu.SMEM),               # coefficients
            pl.BlockSpec((tile_rows, width), lambda i: (i, 0)),  # x tile
        ],
        out_specs=pl.BlockSpec((tile_rows, width), lambda i: (i, 0)),
        compiler_params=pltpu.CompilerParams(
            dimension_semantics=("parallel",)
        ),
    )(coef, x2d)

    out = out2d.reshape(-1)
    if padded:
        out = out[:n]
    return out.reshape(orig_shape).astype(orig_dtype)


if __name__ == "__main__":
    key = jax.random.PRNGKey(0)
    k_x, k_a, k_b, k_c, k_d = jax.random.split(key, 5)

    # Deterministic "parameters" (stand-ins for torch.randn(()) init).
    a = jax.random.normal(k_a, (), dtype=jnp.float32)
    b = jax.random.normal(k_b, (), dtype=jnp.float32)
    c = jax.random.normal(k_c, (), dtype=jnp.float32)
    d = jax.random.normal(k_d, (), dtype=jnp.float32)

    # Input: module usage is x.reshape(-1, 1); small N for the demo.
    N = 2048
    x = jnp.linspace(-jnp.pi, jnp.pi, N, dtype=jnp.float32).reshape(-1, 1)
    x = x + 0.0 * jax.random.normal(k_x, (N, 1), dtype=jnp.float32)

    y = jax.block_until_ready(poly_sine_forward(x, a, b, c, d))
    y_ref = a + b * x + c * x**2 + d * x**3
    assert y.shape == x.shape
    assert jnp.allclose(y, y_ref, atol=1e-5, rtol=1e-5)

    # Exercise the non-divisible (pad fallback) path too.
    x2 = jnp.linspace(-2.0, 2.0, 300, dtype=jnp.float32).reshape(-1, 1)
    y2 = jax.block_until_ready(poly_sine_forward(x2, a, b, c, d))
    y2_ref = a + b * x2 + c * x2**2 + d * x2**3
    assert y2.shape == x2.shape
    assert jnp.allclose(y2, y2_ref, atol=1e-5, rtol=1e-5)

    print("KERNEL_OK")
</pallas_src>

<mosaic_0001>
module attributes {stable_mosaic.version = 11 : i64} {
  func.func @_poly_kernel(%arg0: i32, %arg1: memref<4xf32, #tpu.memory_space<smem>>, %arg2: memref<1x2048xf32, #tpu.memory_space<vmem>>, %arg3: memref<1x2048xf32, #tpu.memory_space<vmem>>) attributes {dimension_semantics = [#tpu.dimension_semantics<parallel>], iteration_bounds = array<i64: 1>, scalar_prefetch = 0 : i64, scratch_operands = 0 : i64, tpu.core_type = #tpu.core_type<tc>, window_params = [{transform_indices = @transform_0, window_bounds = array<i64: 4>}, {transform_indices = @transform_1, window_bounds = array<i64: 1, 2048>}, {transform_indices = @transform_2, window_bounds = array<i64: 1, 2048>}]} {
    %c0 = arith.constant 0 : index
    %0 = memref.load %arg1[%c0] : memref<4xf32, #tpu.memory_space<smem>>
    %c1 = arith.constant 1 : index
    %1 = memref.load %arg1[%c1] : memref<4xf32, #tpu.memory_space<smem>>
    %c2 = arith.constant 2 : index
    %2 = memref.load %arg1[%c2] : memref<4xf32, #tpu.memory_space<smem>>
    %c3 = arith.constant 3 : index
    %3 = memref.load %arg1[%c3] : memref<4xf32, #tpu.memory_space<smem>>
    %c0_0 = arith.constant 0 : index
    %c0_1 = arith.constant 0 : index
    %4 = vector.load %arg2[%c0_0, %c0_1] : memref<1x2048xf32, #tpu.memory_space<vmem>>, vector<1x2048xf32>
    %5 = vector.broadcast %3 : f32 to vector<1x2048xf32>
    %6 = arith.mulf %4, %5 : vector<1x2048xf32>
    %7 = vector.broadcast %2 : f32 to vector<1x2048xf32>
    %8 = arith.addf %7, %6 : vector<1x2048xf32>
    %9 = arith.mulf %4, %8 : vector<1x2048xf32>
    %10 = vector.broadcast %1 : f32 to vector<1x2048xf32>
    %11 = arith.addf %10, %9 : vector<1x2048xf32>
    %12 = arith.mulf %4, %11 : vector<1x2048xf32>
    %13 = vector.broadcast %0 : f32 to vector<1x2048xf32>
    %14 = arith.addf %13, %12 : vector<1x2048xf32>
    %c0_2 = arith.constant 0 : index
    %c0_3 = arith.constant 0 : index
    %15 = vector.load %arg3[%c0_2, %c0_3] : memref<1x2048xf32, #tpu.memory_space<vmem>>, vector<1x2048xf32>
    tpu.vector_store %arg3[%c0_2, %c0_3], %14 {strides = array<i32>} : memref<1x2048xf32, #tpu.memory_space<vmem>>, vector<1x2048xf32>,
    return
  }
  func.func @transform_0(%arg0: i32) -> i32 {
    %c0_i32 = arith.constant 0 : i32
    %c0_i32_0 = arith.constant 0 : i32
    return %c0_i32 : i32
  }
  func.func @transform_1(%arg0: i32) -> (i32, i32) {
    %c0_i32 = arith.constant 0 : i32
    %c0_i32_0 = arith.constant 0 : i32
    return %arg0, %c0_i32 : i32, i32
  }
  func.func @transform_2(%arg0: i32) -> (i32, i32) {
    %c0_i32 = arith.constant 0 : i32
    %c0_i32_0 = arith.constant 0 : i32
    return %arg0, %c0_i32 : i32, i32
  }
}

</mosaic_0001>

<llo_original>
// kernel: tpu_custom_call.1
$region0: #{tpu_custom_call.1}
  #allocation0 [shape = 'u32[]', space=smem, size = 0x4, offset = 0x4, fixed_abs, tag = 'smem constant byte address 0x4 - core index']
  #allocation1 [shape = 'u32[144,128]{1,0:T(1,128)}', space=vmem, size = 0x12000, scoped, tag = 'internal scratch']
  %s0 = inlined_call_operand.hbm [shape: f32[4], index: 0, kind: input, shape index: {}]
  %s1 = inlined_call_operand.hbm [shape: f32[1,2048], index: 1, kind: input, shape index: {}]
  %s2 = inlined_call_operand.hbm [shape: f32[1,2048], index: 2, kind: output, shape index: {}]
  %s3 = sld [smem:[#allocation0]]
  $region26: #{tpu_custom_call.1} parent=0
    _
  %s5 = ssub.s32 1, %s3
  %s6 = scalar_select 0, %s5, %s3
  $region1: #{tpu_custom_call.1} parent=0
    #allocation2 [shape = 'u8[512]{0}', space=smem, size = 0x200, scoped, tag = 'input window, operand 0, single buffered']
    #allocation3 [shape = 's32[1]{0}', space=sflag, size = 0x4, scoped, tag = 'scoped memory for tpu_custom_call.1']
    #allocation4 [shape = 's32[1]{0}', space=sflag, size = 0x4, scoped, tag = 'scoped memory for tpu_custom_call.1']
    #allocation5 [shape = 's32[1]{0}', space=sflag, size = 0x4, scoped, tag = 'scoped memory for tpu_custom_call.1']
    #allocation6 [shape = 'u8[8192]{0}', space=vmem, size = 0x2000, scoped, tag = 'input window, operand 1, single buffered']
    #allocation7 [shape = 'u8[8192]{0}', space=vmem, size = 0x2000, scoped, tag = 'output window, operand 0, single buffered']
    %7 = vsyncpa [#allocation5], 0
    %8 = vsyncpa [#allocation3], 0
    %9 = vsyncpa [#allocation4], 0
    // Predicated region
    $region2: #{tpu_custom_call.1} parent=1 // pred_check
      _
    $region3: #{tpu_custom_call.1} parent=1 // pred_check_branch
      %11 = sbr.rel (0) target = $region5
    $region4: #{tpu_custom_call.1} parent=1 // pred_region
      %s13 = ssub.s32 16, 16
      %14 = vsyncadd [#allocation5], %s13
      %17 = dma.hbm_to_smem %s0, 16, [#allocation2], [#allocation5]
    $region5: #{tpu_custom_call.1} parent=1 // pred_fallthru
      _
    // Predicated region
    $region6: #{tpu_custom_call.1} parent=1 // pred_check
      _
    $region7: #{tpu_custom_call.1} parent=1 // pred_check_branch
      %19 = sbr.rel (0) target = $region9
    $region8: #{tpu_custom_call.1} parent=1 // pred_region
      %s21 = ssub.s32 256, 256
      %22 = vsyncadd [#allocation3], %s21
      %s24 = sshll.u32 [#allocation6], 4
      %s25 = int_to_ptr.vmem [resolvable:$true] %s24
      %27 = dma.hbm_to_vmem [thread:$0]  %s1, 256, %s25, [#allocation3]
    $region9: #{tpu_custom_call.1} parent=1 // pred_fallthru
      _
    // Predicated region
    $region10: #{tpu_custom_call.1} parent=1 // pred_check
      _
    $region11: #{tpu_custom_call.1} parent=1 // pred_check_branch
      %29 = sbr.rel (0) target = $region13
    $region12: #{tpu_custom_call.1} parent=1 // pred_region
      %30 = dma.done [#allocation5], 16
    $region13: #{tpu_custom_call.1} parent=1 // pred_fallthru
      _
    // Predicated region
    $region14: #{tpu_custom_call.1} parent=1 // pred_check
      _
    $region15: #{tpu_custom_call.1} parent=1 // pred_check_branch
      %32 = sbr.rel (0) target = $region17
    $region16: #{tpu_custom_call.1} parent=1 // pred_region
      %33 = dma.done [#allocation3], 256
    $region17: #{tpu_custom_call.1} parent=1 // pred_fallthru
      _
    %34 = sfence
    %s35 = sld [smem:[#allocation2]]
    %s36 = sld [smem:[#allocation2 + $0x1]]
    %s37 = sld [smem:[#allocation2 + $0x2]]
    %s38 = sld [smem:[#allocation2 + $0x3]]
    %v39 = vld [vmem:[#allocation6] sm:$0xff]
    %v40 = vld [vmem:[#allocation6 + $0x8] sm:$0xff]
    %v41 = vstv %s38
    %v42 = vmul.f32 %v39, %v41
    %v43 = vmul.f32 %v40, %v41
    %v44 = vstv %s37
    %v45 = vadd.f32 %v44, %v42
    %v46 = vadd.f32 %v44, %v43
    %v47 = vmul.f32 %v39, %v45
    %v48 = vmul.f32 %v40, %v46
    %v49 = vstv %s36
    %v50 = vadd.f32 %v49, %v47
    %v51 = vadd.f32 %v49, %v48
    %v52 = vmul.f32 %v39, %v50
    %v53 = vmul.f32 %v40, %v51
    %v54 = vstv %s35
    %v55 = vadd.f32 %v54, %v52
    %v56 = vadd.f32 %v54, %v53
    %57 = vst [vmem:[#allocation7] sm:$0xff] %v55
    %58 = vst [vmem:[#allocation7 + $0x8] sm:$0xff] %v56
    // Predicated region
    $region18: #{tpu_custom_call.1} parent=1 // pred_check
      _
    $region19: #{tpu_custom_call.1} parent=1 // pred_check_branch
      %60 = sbr.rel (0) target = $region21
    $region20: #{tpu_custom_call.1} parent=1 // pred_region
      %s62 = ssub.s32 256, 256
      %63 = vsyncadd [#allocation4], %s62
      %s65 = sshll.u32 [#allocation7], 4
      %s66 = int_to_ptr.vmem [resolvable:$true] %s65
      %68 = dma.vmem_to_hbm [thread:$0]  %s66, 256, %s2, [#allocation4]
    $region21: #{tpu_custom_call.1} parent=1 // pred_fallthru
      _
    // Predicated region
    $region22: #{tpu_custom_call.1} parent=1 // pred_check
      _
    $region23: #{tpu_custom_call.1} parent=1 // pred_check_branch
      %70 = sbr.rel (0) target = $region25
    $region24: #{tpu_custom_call.1} parent=1 // pred_region
      %71 = dma.done [#allocation4], 256
    $region25: #{tpu_custom_call.1} parent=1 // pred_fallthru
      _
    %72 = vsyncpa [#allocation3], 1
    %73 = vsyncpa [#allocation4], 1
    %74 = vsyncpa [#allocation5], 1

</llo_original>
